<compile_context>
chip_gen: v6e
topology: v6e:2x2x1
jax: 0.10.0
libtpu: 0.0.40
codegen_flags: <defaults>
</compile_context>

<pallas_src>
import numpy as np
import jax
import jax.numpy as jnp
from jax.experimental import pallas as pl
from jax.experimental.pallas import tpu as pltpu


def _round_up(x, m):
    return ((x + m - 1) // m) * m


def _adaptive_pool_matrix(out_size, in_size):
    # PyTorch AdaptiveAvgPool2d: bin i = [floor(i*I/O), ceil((i+1)*I/O))
    A = np.zeros((out_size, in_size), dtype=np.float32)
    for i in range(out_size):
        start = (i * in_size) // out_size
        end = -((-(i + 1) * in_size) // out_size)  # ceil
        A[i, start:end] = 1.0 / float(end - start)
    return A


def _bilinear_matrix(out_size, in_size):
    # F.upsample(mode='bilinear') == F.interpolate(..., align_corners=False)
    # (modern PyTorch default; legacy pre-0.4 F.upsample acted like
    #  align_corners=True -- flip here if matching an old checkpoint).
    U = np.zeros((out_size, in_size), dtype=np.float32)
    scale = in_size / out_size
    for o in range(out_size):
        src = (o + 0.5) * scale - 0.5
        src = max(src, 0.0)
        i0 = min(int(np.floor(src)), in_size - 1)
        i1 = min(i0 + 1, in_size - 1)
        lam = src - i0
        U[o, i0] += 1.0 - lam
        U[o, i1] += lam
    return U


def _vmem_capacity_bytes():
    try:
        info = pltpu.get_tpu_info()
        cap = getattr(info, "vmem_capacity_bytes", None)
        if cap:
            return int(cap)
    except Exception:
        pass
    return 64 * 1024 * 1024  # conservative (v7x per-core VMEM)


def _pick_hw_tile(hw, c, vmem_cap):
    """Fixed, bounded HW tile (multiple of 128); shrink if the f32 x tile
    (double-buffered) would eat too much VMEM."""
    max_tile = 1024 if vmem_cap >= (100 << 20) else 512   # v5e/v6e vs v7x
    t = min(_round_up(hw, 128), max_tile)
    while t > 128 and 2 * c * t * 4 > vmem_cap // 4:
        t -= 128
    return t


def _resident_spec(shape):
    """Whole-array operand kept resident in VMEM (block index never changes,
    so it is fetched once and not double-buffered)."""
    ms = getattr(pltpu, "MemorySpace", None)
    if ms is not None:
        return pl.BlockSpec(memory_space=ms.VMEM)
    return pl.BlockSpec(shape, lambda n, t: tuple(0 for _ in shape))


def _make_pool_kernel(n_sizes, offsets, sq_sizes, sp, bias_col, hw, t_hw):
    """Pass 1.  Grid (N, HW_tiles): accumulate pooled features over HW tiles in
    a f32 VMEM scratch; on the last tile apply the folded stage-conv +
    bottleneck-slice weights per level and stash the bias in a spare column."""
    need_mask = (hw % t_hw) != 0

    def kernel(x_ref, pt_ref, wcb_ref, bias_ref, small_ref, pooled_acc):
        t = pl.program_id(1)

        @pl.when(t == 0)
        def _():
            pooled_acc[...] = jnp.zeros_like(pooled_acc)

        x = x_ref[0]                                       # (C, T_HW), f32
        if need_mask:                                      # zero the OOB tail
            hw_col = jax.lax.broadcasted_iota(jnp.int32, (1, t_hw), 1)
            x = jnp.where(hw_col + t * t_hw < hw, x, 0.0)
        # (C, T_HW) @ (T_HW, Sp) -> (C, Sp), bf16 on MXU, f32 accumulation.
        pooled_acc[...] += jnp.dot(x.astype(jnp.bfloat16), pt_ref[...],
                                   preferred_element_type=jnp.float32)

        @pl.when(t == pl.num_programs(1) - 1)
        def _():
            pooled = pooled_acc[...]                       # (C, Sp), stays f32
            col = jax.lax.broadcasted_iota(jnp.int32, (1, sp), 1)
            # fold the bottleneck bias into the spare column `bias_col`
            acc = jnp.where(col == bias_col, bias_ref[...], 0.0)
            for k in range(n_sizes):
                # folded stage 1x1 conv + bottleneck slice for level k
                contrib = jnp.dot(wcb_ref[k], pooled,      # bf16 x f32 -> f32
                                  preferred_element_type=jnp.float32)
                mask = ((col >= offsets[k]) &
                        (col < offsets[k] + sq_sizes[k]))
                acc = acc + jnp.where(mask, contrib, 0.0)
            small_ref[0] = acc.astype(small_ref.dtype)

    return kernel


def _out_kernel(x_ref, mt_ref, small_ref, wid_ref, out_ref):
    """Pass 2.  Grid (N, HW_tiles), fully parallel: lane-dense output tile =
    relu(identity slice + bilinear upsample of all levels (+ folded bias))."""
    xb = x_ref[0].astype(jnp.bfloat16)                     # (C, T_HW)
    acc = jnp.dot(wid_ref[...], xb, preferred_element_type=jnp.float32)
    acc = acc + jnp.dot(small_ref[0], mt_ref[...],
                        preferred_element_type=jnp.float32)
    out_ref[0] = jnp.maximum(acc, 0.0).astype(out_ref.dtype)


def psp_module_forward(x_nchw, params, sizes=(1, 2, 3, 6),
                       out_dtype=jnp.float32):
    N, C, H, W = x_nchw.shape
    Cout = params["bottleneck_bias"].shape[0]
    n_sizes = len(sizes)
    HW = H * W

    sq = [s * s for s in sizes]
    offsets = [int(np.sum(sq[:k], dtype=np.int64)) for k in range(n_sizes)]
    s_total = int(np.sum(sq))
    bias_col = s_total                       # spare (padded) column for the bias
    Sp = _round_up(s_total + 1, 128)         # lane-dense pyramid-bin axis

    vmem_cap = _vmem_capacity_bytes()
    T_HW = _pick_hw_tile(HW, C, vmem_cap)
    n_t = -(-HW // T_HW)
    HW_pad = n_t * T_HW                      # constant matrices padded to this

    # ---- constant pooling / bilinear matrices, stacked across levels ------
    P_all = np.zeros((Sp, HW_pad), np.float32)
    M_all = np.zeros((HW_pad, Sp), np.float32)
    for k, s in enumerate(sizes):
        Ah = _adaptive_pool_matrix(s, H)
        Aw = _adaptive_pool_matrix(s, W)
        Uh = _bilinear_matrix(H, s)
        Uw = _bilinear_matrix(W, s)
        P_all[offsets[k]:offsets[k] + sq[k], :HW] = np.kron(Ah, Aw)
        M_all[:HW, offsets[k]:offsets[k] + sq[k]] = np.kron(Uh, Uw)
    M_all[:HW, bias_col] = 1.0               # picks up the bias column of `small`
    p_t = jnp.asarray(P_all.T, dtype=jnp.bfloat16)    # (HW_pad, Sp)
    m_t = jnp.asarray(M_all.T, dtype=jnp.bfloat16)    # (Sp, HW_pad)

    # ---- weights: fold each stage conv into its bottleneck slice ----------
    wb_full = params["bottleneck_weight"].reshape(Cout, (n_sizes + 1) * C)
    wcb = jnp.stack(
        [wb_full[:, k * C:(k + 1) * C] @ params["stage_weights"][k].reshape(C, C)
         for k in range(n_sizes)], axis=0).astype(jnp.bfloat16)   # (n, Cout, C)
    w_id = wb_full[:, n_sizes * C:].astype(jnp.bfloat16)          # (Cout, C)
    bias = params["bottleneck_bias"].reshape(Cout, 1).astype(jnp.float32)

    # channels-first, flattened over space; NO separate bf16 conversion pass.
    x_flat = x_nchw.reshape(N, C, HW)
    x_bytes = jnp.dtype(x_flat.dtype).itemsize
    out_bytes = jnp.dtype(out_dtype).itemsize

    # ---- VMEM limits derived from the actual block sizes ------------------
    vmem_p1 = int(1.5 * (2 * C * T_HW * x_bytes          # x tiles (double buf)
                         + 2 * T_HW * Sp * 2             # p_t tiles
                         + n_sizes * Cout * C * 2        # wcb (resident)
                         + Cout * 128 * 4                # bias (lane-padded)
                         + 2 * Cout * Sp * 2             # small out tiles
                         + C * Sp * 4                    # pooled_acc scratch
                         + Cout * C * 4 + 2 * Cout * Sp * 4)) + (4 << 20)
    vmem_p2 = int(1.5 * (2 * C * T_HW * x_bytes
                         + 2 * Sp * T_HW * 2
                         + 2 * Cout * Sp * 2
                         + Cout * C * 2                  # w_id (resident)
                         + 2 * Cout * T_HW * out_bytes
                         + C * T_HW * 2 + Cout * T_HW * 4)) + (4 << 20)
    cap_hi = min(112 << 20, vmem_cap)
    clamp = lambda b: int(min(max(b, 16 << 20), cap_hi))

    # ---- pass 1: adaptive pooling (all levels) + folded 1x1 convs ---------
    small = pl.pallas_call(
        _make_pool_kernel(n_sizes, offsets, sq, Sp, bias_col, HW, T_HW),
        out_shape=jax.ShapeDtypeStruct((N, Cout, Sp), jnp.bfloat16),
        grid=(N, n_t),
        in_specs=[
            pl.BlockSpec((1, C, T_HW), lambda n, t: (n, 0, t)),
            pl.BlockSpec((T_HW, Sp), lambda n, t: (t, 0)),
            _resident_spec((n_sizes, Cout, C)),   # wcb, single-buffered
            _resident_spec((Cout, 1)),            # bias, single-buffered
        ],
        out_specs=pl.BlockSpec((1, Cout, Sp), lambda n, t: (n, 0, 0)),
        scratch_shapes=[pltpu.VMEM((C, Sp), jnp.float32)],
        compiler_params=pltpu.CompilerParams(
            dimension_semantics=("parallel", "arbitrary"),
            vmem_limit_bytes=clamp(vmem_p1)),
    )(x_flat, p_t, wcb, bias)

    # ---- pass 2: identity slice + bilinear upsample (+ folded bias) + ReLU -
    out = pl.pallas_call(
        _out_kernel,
        out_shape=jax.ShapeDtypeStruct((N, Cout, HW), out_dtype),
        grid=(N, n_t),
        in_specs=[
            pl.BlockSpec((1, C, T_HW), lambda n, t: (n, 0, t)),
            pl.BlockSpec((Sp, T_HW), lambda n, t: (0, t)),
            pl.BlockSpec((1, Cout, Sp), lambda n, t: (n, 0, 0)),
            _resident_spec((Cout, C)),            # w_id, single-buffered
        ],
        out_specs=pl.BlockSpec((1, Cout, T_HW), lambda n, t: (n, 0, t)),
        compiler_params=pltpu.CompilerParams(
            dimension_semantics=("parallel", "parallel"),
            vmem_limit_bytes=clamp(vmem_p2)),
    )(x_flat, m_t, small, w_id)

    # no channel padding, no post-kernel slice -> reshape is free
    return out.reshape(N, Cout, H, W)


def _psp_reference(x_nchw, params, sizes):
    """Pure-JAX f32 reference (direct transcription of the PyTorch module)."""
    N, C, H, W = x_nchw.shape
    HW = H * W
    Cout = params["bottleneck_bias"].shape[0]
    xf = x_nchw.reshape(N, C, HW).astype(jnp.float32)
    wb_full = params["bottleneck_weight"].reshape(Cout, (len(sizes) + 1) * C)
    branches = []
    for k, s in enumerate(sizes):
        P = jnp.asarray(np.kron(_adaptive_pool_matrix(s, H),
                                _adaptive_pool_matrix(s, W)))   # (s*s, HW)
        M = jnp.asarray(np.kron(_bilinear_matrix(H, s),
                                _bilinear_matrix(W, s)))        # (HW, s*s)
        wc = params["stage_weights"][k].reshape(C, C)
        pooled = jnp.einsum("nch,sh->ncs", xf, P)
        conv = jnp.einsum("oc,ncs->nos", wc, pooled)
        branches.append(jnp.einsum("hs,nos->noh", M, conv))
    branches.append(xf)
    cat = jnp.concatenate(branches, axis=1)                     # (N, 5C, HW)
    out = jnp.einsum("oc,nch->noh", wb_full, cat)
    out = out + params["bottleneck_bias"][None, :, None]
    return jnp.maximum(out, 0.0).reshape(N, Cout, H, W)


if __name__ == "__main__":
    N, C, H, W = 2, 4, 16, 16
    Cout = 32
    sizes = (1, 2, 3, 6)

    key = jax.random.PRNGKey(0)
    ks = jax.random.split(key, len(sizes) + 3)
    params = {
        # stage convs: Conv2d(C, C, 1, bias=False) -> weight (C, C, 1, 1)
        "stage_weights": [
            0.1 * jax.random.normal(ks[i], (C, C, 1, 1), jnp.float32)
            for i in range(len(sizes))
        ],
        # bottleneck: Conv2d(C*(len(sizes)+1), Cout, 1) -> weight (Cout, 5C, 1, 1)
        "bottleneck_weight": 0.1 * jax.random.normal(
            ks[len(sizes)], (Cout, C * (len(sizes) + 1), 1, 1), jnp.float32),
        "bottleneck_bias": 0.1 * jax.random.normal(
            ks[len(sizes) + 1], (Cout,), jnp.float32),
    }
    x = jax.random.normal(ks[len(sizes) + 2], (N, C, H, W), jnp.float32)

    out = jax.block_until_ready(psp_module_forward(x, params, sizes))
    assert out.shape == (N, Cout, H, W)
    assert bool(jnp.all(out >= 0.0))                 # ReLU

    # sanity check against the f32 reference (bf16 weight streaming -> loose tol)
    ref = jax.block_until_ready(_psp_reference(x, params, sizes))
    max_err = float(jnp.max(jnp.abs(out - ref)))
    assert max_err < 0.1, f"max abs err vs f32 reference: {max_err}"
    print("KERNEL_OK")
</pallas_src>

<mosaic_0001>
module attributes {stable_mosaic.version = 11 : i64} {
  func.func @kernel(%arg0: i32, %arg1: i32, %arg2: memref<1x4x256xf32, #tpu.memory_space<vmem>>, %arg3: memref<256x128xbf16, #tpu.memory_space<vmem>>, %arg4: memref<4x32x4xbf16, #tpu.memory_space<vmem>>, %arg5: memref<32x1xf32, #tpu.memory_space<vmem>>, %arg6: memref<1x32x128xbf16, #tpu.memory_space<vmem>>, %arg7: memref<4x128xf32, #tpu.memory_space<vmem>>) attributes {dimension_semantics = [#tpu.dimension_semantics<parallel>, #tpu.dimension_semantics<arbitrary>], iteration_bounds = array<i64: 2, 1>, scalar_prefetch = 0 : i64, scratch_operands = 1 : i64, tpu.core_type = #tpu.core_type<tc>, window_params = [{transform_indices = @transform_0, window_bounds = array<i64: 1, 4, 256>}, {transform_indices = @transform_1, window_bounds = array<i64: 256, 128>}, {pipeline_mode = #tpu.pipeline_mode<synchronous>, transform_indices = @transform_2, window_bounds = array<i64: 4, 32, 4>}, {pipeline_mode = #tpu.pipeline_mode<synchronous>, transform_indices = @transform_3, window_bounds = array<i64: 32, 1>}, {transform_indices = @transform_4, window_bounds = array<i64: 1, 32, 128>}]} {
    %c0_i32 = arith.constant 0 : i32
    %0 = arith.cmpi eq, %arg1, %c0_i32 : i32
    %1 = arith.extui %0 : i1 to i32
    %c0_i32_0 = arith.constant 0 : i32
    %2 = arith.cmpi ne, %1, %c0_i32_0 : i32
    scf.if %2 {
      %cst_11 = arith.constant 0.000000e+00 : f32
      %14 = vector.broadcast %cst_11 : f32 to vector<4x128xf32>
      %c0_12 = arith.constant 0 : index
      %c0_13 = arith.constant 0 : index
      %15 = vector.load %arg7[%c0_12, %c0_13] : memref<4x128xf32, #tpu.memory_space<vmem>>, vector<4x128xf32>
      tpu.vector_store %arg7[%c0_12, %c0_13], %14 {strides = array<i32>} : memref<4x128xf32, #tpu.memory_space<vmem>>, vector<4x128xf32>,
    } else {
    }
    %c0 = arith.constant 0 : index
    %c0_1 = arith.constant 0 : index
    %c0_2 = arith.constant 0 : index
    %3 = vector.load %arg2[%c0, %c0_1, %c0_2] : memref<1x4x256xf32, #tpu.memory_space<vmem>>, vector<1x4x256xf32>
    %4 = vector.shape_cast %3 : vector<1x4x256xf32> to vector<4x256xf32>
    %c0_3 = arith.constant 0 : index
    %c0_4 = arith.constant 0 : index
    %5 = vector.load %arg7[%c0_3, %c0_4] : memref<4x128xf32, #tpu.memory_space<vmem>>, vector<4x128xf32>
    %6 = arith.truncf %4 : vector<4x256xf32> to vector<4x256xbf16>
    %c0_5 = arith.constant 0 : index
    %c0_6 = arith.constant 0 : index
    %7 = vector.load %arg3[%c0_5, %c0_6] : memref<256x128xbf16, #tpu.memory_space<vmem>>, vector<256x128xbf16>
    %cst = arith.constant dense<0.000000e+00> : vector<4x128xf32>
    %8 = tpu.matmul %6, %7, %cst {dimension_numbers = #tpu.dot_dimension_numbers<[1], [0], [0], [1], [0, 0, 1, 1], [], []>} : vector<4x256xbf16>, vector<256x128xbf16>, vector<4x128xf32> -> vector<4x128xf32>
    %9 = arith.addf %5, %8 : vector<4x128xf32>
    %c0_7 = arith.constant 0 : index
    %c0_8 = arith.constant 0 : index
    %10 = vector.load %arg7[%c0_7, %c0_8] : memref<4x128xf32, #tpu.memory_space<vmem>>, vector<4x128xf32>
    tpu.vector_store %arg7[%c0_7, %c0_8], %9 {strides = array<i32>} : memref<4x128xf32, #tpu.memory_space<vmem>>, vector<4x128xf32>,
    %c0_i32_9 = arith.constant 0 : i32
    %11 = arith.cmpi eq, %arg1, %c0_i32_9 : i32
    %12 = arith.extui %11 : i1 to i32
    %c0_i32_10 = arith.constant 0 : i32
    %13 = arith.cmpi ne, %12, %c0_i32_10 : i32
    scf.if %13 {
      %c0_11 = arith.constant 0 : index
      %c0_12 = arith.constant 0 : index
      %14 = vector.load %arg7[%c0_11, %c0_12] : memref<4x128xf32, #tpu.memory_space<vmem>>, vector<4x128xf32>
      %15 = tpu.iota {dimensions = array<i32: 1>} : vector<1x128xi32>
      %c50_i32 = arith.constant 50 : i32
      %16 = vector.broadcast %c50_i32 : i32 to vector<1x128xi32>
      %17 = arith.cmpi eq, %15, %16 : vector<1x128xi32>
      %c0_13 = arith.constant 0 : index
      %c0_14 = arith.constant 0 : index
      %18 = vector.load %arg5[%c0_13, %c0_14] : memref<32x1xf32, #tpu.memory_space<vmem>>, vector<32x1xf32>
      %cst_15 = arith.constant 0.000000e+00 : f32
      %19 = vector.shape_cast %17 : vector<1x128xi1> to vector<1x128xi1>
      %20 = vector.broadcast %19 : vector<1x128xi1> to vector<32x128xi1>
      %21 = vector.shape_cast %18 : vector<32x1xf32> to vector<32x1xf32>
      %22 = vector.broadcast %21 : vector<32x1xf32> to vector<32x128xf32>
      %23 = vector.broadcast %cst_15 : f32 to vector<32x128xf32>
      %24 = arith.select %20, %22, %23 : vector<32x128xi1>, vector<32x128xf32>
      %c0_16 = arith.constant 0 : index
      %c0_17 = arith.constant 0 : index
      %c0_18 = arith.constant 0 : index
      %25 = vector.load %arg4[%c0_16, %c0_17, %c0_18] : memref<4x32x4xbf16, #tpu.memory_space<vmem>>, vector<1x32x4xbf16>
      %26 = vector.shape_cast %25 : vector<1x32x4xbf16> to vector<32x4xbf16>
      %cst_19 = arith.constant dense<0.000000e+00> : vector<32x128xf32>
      %27 = tpu.matmul %26, %14, %cst_19 {dimension_numbers = #tpu.dot_dimension_numbers<[1], [0], [0], [1], [0, 0, 1, 1], [], []>} : vector<32x4xbf16>, vector<4x128xf32>, vector<32x128xf32> -> vector<32x128xf32>
      %c0_i32_20 = arith.constant 0 : i32
      %28 = vector.broadcast %c0_i32_20 : i32 to vector<1x128xi32>
      %29 = arith.cmpi sge, %15, %28 : vector<1x128xi32>
      %c1_i32 = arith.constant 1 : i32
      %30 = vector.broadcast %c1_i32 : i32 to vector<1x128xi32>
      %31 = arith.cmpi slt, %15, %30 : vector<1x128xi32>
      %32 = arith.andi %29, %31 : vector<1x128xi1>
      %cst_21 = arith.constant 0.000000e+00 : f32
      %33 = vector.shape_cast %32 : vector<1x128xi1> to vector<1x128xi1>
      %34 = vector.broadcast %33 : vector<1x128xi1> to vector<32x128xi1>
      %35 = vector.broadcast %cst_21 : f32 to vector<32x128xf32>
      %36 = arith.select %34, %27, %35 : vector<32x128xi1>, vector<32x128xf32>
      %37 = arith.addf %24, %36 : vector<32x128xf32>
      %c1 = arith.constant 1 : index
      %c0_22 = arith.constant 0 : index
      %c0_23 = arith.constant 0 : index
      %38 = vector.load %arg4[%c1, %c0_22, %c0_23] : memref<4x32x4xbf16, #tpu.memory_space<vmem>>, vector<1x32x4xbf16>
      %39 = vector.shape_cast %38 : vector<1x32x4xbf16> to vector<32x4xbf16>
      %cst_24 = arith.constant dense<0.000000e+00> : vector<32x128xf32>
      %40 = tpu.matmul %39, %14, %cst_24 {dimension_numbers = #tpu.dot_dimension_numbers<[1], [0], [0], [1], [0, 0, 1, 1], [], []>} : vector<32x4xbf16>, vector<4x128xf32>, vector<32x128xf32> -> vector<32x128xf32>
      %c1_i32_25 = arith.constant 1 : i32
      %41 = vector.broadcast %c1_i32_25 : i32 to vector<1x128xi32>
      %42 = arith.cmpi sge, %15, %41 : vector<1x128xi32>
      %c5_i32 = arith.constant 5 : i32
      %43 = vector.broadcast %c5_i32 : i32 to vector<1x128xi32>
      %44 = arith.cmpi slt, %15, %43 : vector<1x128xi32>
      %45 = arith.andi %42, %44 : vector<1x128xi1>
      %cst_26 = arith.constant 0.000000e+00 : f32
      %46 = vector.shape_cast %45 : vector<1x128xi1> to vector<1x128xi1>
      %47 = vector.broadcast %46 : vector<1x128xi1> to vector<32x128xi1>
      %48 = vector.broadcast %cst_26 : f32 to vector<32x128xf32>
      %49 = arith.select %47, %40, %48 : vector<32x128xi1>, vector<32x128xf32>
      %50 = arith.addf %37, %49 : vector<32x128xf32>
      %c2 = arith.constant 2 : index
      %c0_27 = arith.constant 0 : index
      %c0_28 = arith.constant 0 : index
      %51 = vector.load %arg4[%c2, %c0_27, %c0_28] : memref<4x32x4xbf16, #tpu.memory_space<vmem>>, vector<1x32x4xbf16>
      %52 = vector.shape_cast %51 : vector<1x32x4xbf16> to vector<32x4xbf16>
      %cst_29 = arith.constant dense<0.000000e+00> : vector<32x128xf32>
      %53 = tpu.matmul %52, %14, %cst_29 {dimension_numbers = #tpu.dot_dimension_numbers<[1], [0], [0], [1], [0, 0, 1, 1], [], []>} : vector<32x4xbf16>, vector<4x128xf32>, vector<32x128xf32> -> vector<32x128xf32>
      %c5_i32_30 = arith.constant 5 : i32
      %54 = vector.broadcast %c5_i32_30 : i32 to vector<1x128xi32>
      %55 = arith.cmpi sge, %15, %54 : vector<1x128xi32>
      %c14_i32 = arith.constant 14 : i32
      %56 = vector.broadcast %c14_i32 : i32 to vector<1x128xi32>
      %57 = arith.cmpi slt, %15, %56 : vector<1x128xi32>
      %58 = arith.andi %55, %57 : vector<1x128xi1>
      %cst_31 = arith.constant 0.000000e+00 : f32
      %59 = vector.shape_cast %58 : vector<1x128xi1> to vector<1x128xi1>
      %60 = vector.broadcast %59 : vector<1x128xi1> to vector<32x128xi1>
      %61 = vector.broadcast %cst_31 : f32 to vector<32x128xf32>
      %62 = arith.select %60, %53, %61 : vector<32x128xi1>, vector<32x128xf32>
      %63 = arith.addf %50, %62 : vector<32x128xf32>
      %c3 = arith.constant 3 : index
      %c0_32 = arith.constant 0 : index
      %c0_33 = arith.constant 0 : index
      %64 = vector.load %arg4[%c3, %c0_32, %c0_33] : memref<4x32x4xbf16, #tpu.memory_space<vmem>>, vector<1x32x4xbf16>
      %65 = vector.shape_cast %64 : vector<1x32x4xbf16> to vector<32x4xbf16>
      %cst_34 = arith.constant dense<0.000000e+00> : vector<32x128xf32>
      %66 = tpu.matmul %65, %14, %cst_34 {dimension_numbers = #tpu.dot_dimension_numbers<[1], [0], [0], [1], [0, 0, 1, 1], [], []>} : vector<32x4xbf16>, vector<4x128xf32>, vector<32x128xf32> -> vector<32x128xf32>
      %c14_i32_35 = arith.constant 14 : i32
      %67 = vector.broadcast %c14_i32_35 : i32 to vector<1x128xi32>
      %68 = arith.cmpi sge, %15, %67 : vector<1x128xi32>
      %c50_i32_36 = arith.constant 50 : i32
      %69 = vector.broadcast %c50_i32_36 : i32 to vector<1x128xi32>
      %70 = arith.cmpi slt, %15, %69 : vector<1x128xi32>
      %71 = arith.andi %68, %70 : vector<1x128xi1>
      %cst_37 = arith.constant 0.000000e+00 : f32
      %72 = vector.shape_cast %71 : vector<1x128xi1> to vector<1x128xi1>
      %73 = vector.broadcast %72 : vector<1x128xi1> to vector<32x128xi1>
      %74 = vector.broadcast %cst_37 : f32 to vector<32x128xf32>
      %75 = arith.select %73, %66, %74 : vector<32x128xi1>, vector<32x128xf32>
      %76 = arith.addf %63, %75 : vector<32x128xf32>
      %77 = arith.truncf %76 : vector<32x128xf32> to vector<32x128xbf16>
      %c0_38 = arith.constant 0 : index
      %c0_39 = arith.constant 0 : index
      %c0_40 = arith.constant 0 : index
      %78 = vector.load %arg6[%c0_38, %c0_39, %c0_40] : memref<1x32x128xbf16, #tpu.memory_space<vmem>>, vector<1x32x128xbf16>
      %79 = vector.shape_cast %78 : vector<1x32x128xbf16> to vector<32x128xbf16>
      %80 = vector.shape_cast %77 : vector<32x128xbf16> to vector<1x32x128xbf16>
      tpu.vector_store %arg6[%c0_38, %c0_39, %c0_40], %80 {strides = array<i32>} : memref<1x32x128xbf16, #tpu.memory_space<vmem>>, vector<1x32x128xbf16>,
    } else {
    }
    return
  }
  func.func @transform_0(%arg0: i32, %arg1: i32) -> (i32, i32, i32) {
    %c0_i32 = arith.constant 0 : i32
    %c0_i32_0 = arith.constant 0 : i32
    return %arg0, %c0_i32, %arg1 : i32, i32, i32
  }
  func.func @transform_1(%arg0: i32, %arg1: i32) -> (i32, i32) {
    %c0_i32 = arith.constant 0 : i32
    %c0_i32_0 = arith.constant 0 : i32
    return %arg1, %c0_i32 : i32, i32
  }
  func.func @transform_2(%arg0: i32, %arg1: i32) -> (i32, i32, i32) {
    %c0_i32 = arith.constant 0 : i32
    %c0_i32_0 = arith.constant 0 : i32
    %c0_i32_1 = arith.constant 0 : i32
    %c0_i32_2 = arith.constant 0 : i32
    return %c0_i32, %c0_i32_0, %c0_i32_1 : i32, i32, i32
  }
  func.func @transform_3(%arg0: i32, %arg1: i32) -> (i32, i32) {
    %c0_i32 = arith.constant 0 : i32
    %c0_i32_0 = arith.constant 0 : i32
    %c0_i32_1 = arith.constant 0 : i32
    return %c0_i32, %c0_i32_0 : i32, i32
  }
  func.func @transform_4(%arg0: i32, %arg1: i32) -> (i32, i32, i32) {
    %c0_i32 = arith.constant 0 : i32
    %c0_i32_0 = arith.constant 0 : i32
    %c0_i32_1 = arith.constant 0 : i32
    return %arg0, %c0_i32, %c0_i32_0 : i32, i32, i32
  }
}

</mosaic_0001>

<llo_original>
// kernel: tpu_custom_call.1
$region0: #{tpu_custom_call.1}
  #allocation0 [shape = 'u32[]', space=smem, size = 0x4, offset = 0x4, fixed_abs, tag = 'smem constant byte address 0x4 - core index']
  #allocation1 [shape = 'u32[144,128]{1,0:T(1,128)}', space=vmem, size = 0x12000, scoped, tag = 'internal scratch']
  #allocation2 [shape = 'f32[4,128]{1,0:T(4,128)}', space=vmem, size = 0x800, scoped, tag = 'scratch operand']
  %s0 = inlined_call_operand.vmem [shape: f32[2,4,256], index: 0, kind: input, shape index: {}]
  %s1 = inlined_call_operand.hbm [shape: bf16[256,128], index: 1, kind: input, shape index: {}]
  %s2 = inlined_call_operand.vmem [shape: bf16[4,32,4], index: 2, kind: input, shape index: {}]
  %s3 = inlined_call_operand.vmem [shape: f32[32,1], index: 3, kind: input, shape index: {}]
  %s4 = inlined_call_operand.hbm [shape: bf16[2,32,128], index: 4, kind: output, shape index: {}]
  %s5 = sld [smem:[#allocation0]]
  $region61: #{tpu_custom_call.1} parent=0
    _
  %s7 = ssub.s32 1, %s5
  %s8 = scalar_select 0, %s7, %s5
  $region1: #{tpu_custom_call.1} parent=0
    #allocation3 [shape = 'u8[65536]{0}', space=vmem, size = 0x10000, scoped, tag = 'input window, operand 1, single buffered']
    #allocation4 [shape = 's32[2]{0}', space=sflag, size = 0x8, scoped, tag = 'scoped memory for tpu_custom_call.1']
    #allocation5 [shape = 's32[2]{0}', space=sflag, size = 0x8, scoped, tag = 'scoped memory for tpu_custom_call.1']
    #allocation6 [shape = 'u8[16384]{0}', space=vmem, size = 0x4000, scoped, tag = 'output window, operand 0']
    %9 = vsyncpa [#allocation4], 0
    %10 = vsyncpa [#allocation5], 0
    %s11 = scalar_lea.sflag [#allocation5], 1
    %12 = vsyncpa %s11, 0
    loop: start=0, step=1, limit=4
    $region2: #{tpu_custom_call.1} parent=1 // loop_pre_header
      _
    $region3: #{tpu_custom_call.1} parent=1 // loop_header
      %s14 = sphi 0, %s18
      %p15 = scmp.ge.s32.totalorder %s14, 4
      %s21 = sphi 0, %s33
      %s22 = sphi 0, %s29
      %s23 = sphi 0, %s21
      %s24 = sphi 0, %s22
      %s25 = sphi 0, %s23
      %s26 = sphi 0, %s24
      %s38 = sphi 0, %s40
      %s41 = sphi 0, %s38
      %s42 = sphi 0, %s41
      %s58 = sphi 0, %s42
      %s64 = sphi 0, %s66
      %s67 = sphi 0, %s64
      %s68 = sphi 0, %s67
      %s84 = sphi 0, %s68
      %s88 = sphi 0, %s88
      %s90 = sphi 0, %s88
      %s91 = sphi 0, %s90
      %s105 = sphi 0, %s91
      %s109 = sphi 0, %s109
      %s111 = sphi 0, %s109
      %s112 = sphi 0, %s111
      %s126 = sphi 0, %s112
      %s132 = sphi 0, %s134
      %s135 = sphi 0, %s132
      %s136 = sphi 0, %s135
      %s152 = sphi 0, %s136
    $region4: #{tpu_custom_call.1} parent=1 // loop_header_branch
      %17 = sbr.rel (%p15) target = $region8
    $region5: #{tpu_custom_call.1} parent=1 // loop_body
      %s19 = ssub.s32 %s14, 1
      %s20 = ssub.s32 %s14, 2
      %s27 = sadd.s32 1, %s22
      %p28 = scmp.ge.s32.totalorder %s27, 1
      %s29 = scalar_select %p28, 0, %s27
      %s30 = sadd.s32 1, %s21
      %s31 = scalar_select %p28, %s30, %s21
      %p32 = scmp.ge.s32.totalorder %s31, 2
      %s33 = scalar_select %p32, 0, %s31
      %s34 = ssub.s32 %s21, %s33
      %s35 = ssub.s32 %s22, %s29
      %s36 = sor.u32 %s34, %s35
      %p37 = scmp.eq.s32.totalorder %s36, 0
      %s39 = sadd.s32 %s38, 1
      %s40 = scalar_select %p37, %s38, %s39
      %p43 = pneg %p37
      %p44 = scmp.eq.s32.totalorder %s14, 1
      %p45 = por %p43, %p44
      %p46 = scmp.ne.s32.totalorder %s38, %s41
      %p47 = scmp.eq.s32.totalorder %s14, 0
      %p48 = por %p46, %p47
      %p49 = scmp.ne.s32.totalorder %s38, %s41
      %p50 = scmp.eq.s32.totalorder %s19, 1
      %p51 = por %p49, %p50
      %p52 = scmp.ne.s32.totalorder %s41, %s42
      %p53 = scmp.eq.s32.totalorder %s19, 0
      %p54 = por %p52, %p53
      %p55 = scmp.ne.s32.totalorder %s41, %s42
      %p56 = scmp.eq.s32.totalorder %s20, 1
      %p57 = por %p55, %p56
      %p59 = scmp.ne.s32.totalorder %s42, %s58
      %p60 = scmp.eq.s32.totalorder %s20, 0
      %p61 = por %p59, %p60
      %s62 = ssub.s32 %s22, %s29
      %p63 = scmp.eq.s32.totalorder %s62, 0
      %s65 = sadd.s32 %s64, 1
      %s66 = scalar_select %p63, %s64, %s65
      %p69 = pneg %p63
      %p70 = scmp.eq.s32.totalorder %s14, 1
      %p71 = por %p69, %p70
      %p72 = scmp.ne.s32.totalorder %s64, %s67
      %p73 = scmp.eq.s32.totalorder %s14, 0
      %p74 = por %p72, %p73
      %p75 = scmp.ne.s32.totalorder %s64, %s67
      %p76 = scmp.eq.s32.totalorder %s19, 1
      %p77 = por %p75, %p76
      %p78 = scmp.ne.s32.totalorder %s67, %s68
      %p79 = scmp.eq.s32.totalorder %s19, 0
      %p80 = por %p78, %p79
      %p81 = scmp.ne.s32.totalorder %s67, %s68
      %p82 = scmp.eq.s32.totalorder %s20, 1
      %p83 = por %p81, %p82
      %p85 = scmp.ne.s32.totalorder %s68, %s84
      %p86 = scmp.eq.s32.totalorder %s20, 0
      %p87 = por %p85, %p86
      %s89 = sadd.s32 %s88, 1
      %p92 = scmp.eq.s32.totalorder %s14, 1
      %p93 = scmp.ne.s32.totalorder %s88, %s90
      %p94 = scmp.eq.s32.totalorder %s14, 0
      %p95 = por %p93, %p94
      %p96 = scmp.ne.s32.totalorder %s88, %s90
      %p97 = scmp.eq.s32.totalorder %s19, 1
      %p98 = por %p96, %p97
      %p99 = scmp.ne.s32.totalorder %s90, %s91
      %p100 = scmp.eq.s32.totalorder %s19, 0
      %p101 = por %p99, %p100
      %p102 = scmp.ne.s32.totalorder %s90, %s91
      %p103 = scmp.eq.s32.totalorder %s20, 1
      %p104 = por %p102, %p103
      %p106 = scmp.ne.s32.totalorder %s91, %s105
      %p107 = scmp.eq.s32.totalorder %s20, 0
      %p108 = por %p106, %p107
      %s110 = sadd.s32 %s109, 1
      %p113 = scmp.eq.s32.totalorder %s14, 1
      %p114 = scmp.ne.s32.totalorder %s109, %s111
      %p115 = scmp.eq.s32.totalorder %s14, 0
      %p116 = por %p114, %p115
      %p117 = scmp.ne.s32.totalorder %s109, %s111
      %p118 = scmp.eq.s32.totalorder %s19, 1
      %p119 = por %p117, %p118
      %p120 = scmp.ne.s32.totalorder %s111, %s112
      %p121 = scmp.eq.s32.totalorder %s19, 0
      %p122 = por %p120, %p121
      %p123 = scmp.ne.s32.totalorder %s111, %s112
      %p124 = scmp.eq.s32.totalorder %s20, 1
      %p125 = por %p123, %p124
      %p127 = scmp.ne.s32.totalorder %s112, %s126
      %p128 = scmp.eq.s32.totalorder %s20, 0
      %p129 = por %p127, %p128
      %s130 = ssub.s32 %s21, %s33
      %p131 = scmp.eq.s32.totalorder %s130, 0
      %s133 = sadd.s32 %s132, 1
      %s134 = scalar_select %p131, %s132, %s133
      %p137 = pneg %p131
      %p138 = scmp.eq.s32.totalorder %s14, 1
      %p139 = por %p137, %p138
      %p140 = scmp.ne.s32.totalorder %s132, %s135
      %p141 = scmp.eq.s32.totalorder %s14, 0
      %p142 = por %p140, %p141
      %p143 = scmp.ne.s32.totalorder %s132, %s135
      %p144 = scmp.eq.s32.totalorder %s19, 1
      %p145 = por %p143, %p144
      %p146 = scmp.ne.s32.totalorder %s135, %s136
      %p147 = scmp.eq.s32.totalorder %s19, 0
      %p148 = por %p146, %p147
      %p149 = scmp.ne.s32.totalorder %s135, %s136
      %p150 = scmp.eq.s32.totalorder %s20, 1
      %p151 = por %p149, %p150
      %p153 = scmp.ne.s32.totalorder %s136, %s152
      %p154 = scmp.eq.s32.totalorder %s20, 0
      %p155 = por %p153, %p154
      %p156 = scmp.le.s32.totalorder 1, %s14
      %p157 = scmp.lt.s32.totalorder %s14, 3
      %p158 = pnand %p156, %p157
      %p159 = pneg %p158
      // Predicated region
      $region9: #{tpu_custom_call.1} parent=5 // pred_check
        _
      $region10: #{tpu_custom_call.1} parent=5 // pred_check_branch
        %161 = sbr.rel (%p158) target = $region12
      $region11: #{tpu_custom_call.1} parent=5 // pred_region
        %s162 = ssub.s32 %s14, 1
        // Predicated region
        $region13: #{tpu_custom_call.1} parent=11 // pred_check
          %p163 = pneg %p80
        $region14: #{tpu_custom_call.1} parent=11 // pred_check_branch
          %165 = sbr.rel (%p163) target = $region16
        $region15: #{tpu_custom_call.1} parent=11 // pred_region
          %s166 = smul.u32 32, %s24
          %s168 = ssub.s32 2048, 2048
          %169 = vsyncadd [#allocation4], %s168
          %s170 = smul.addr %s166, 64
          %s171 = scalar_lea.hbm %s1, %s170
          %s172 = sshll.u32 [#allocation3], 4
          %s173 = int_to_ptr.vmem [resolvable:$true] %s172
          %178 = dma.hbm_to_vmem [thread:$0]  %s171, 2048, %s173, [#allocation4], 64, 64, 4
        $region16: #{tpu_custom_call.1} parent=11 // pred_fallthru
          _
        // Predicated region
        $region17: #{tpu_custom_call.1} parent=11 // pred_check
          %p179 = pneg %p101
        $region18: #{tpu_custom_call.1} parent=11 // pred_check_branch
          %181 = sbr.rel (%p179) target = $region20
        $region19: #{tpu_custom_call.1} parent=11 // pred_region
          _
        $region20: #{tpu_custom_call.1} parent=11 // pred_fallthru
          _
        // Predicated region
        $region21: #{tpu_custom_call.1} parent=11 // pred_check
          %p182 = pneg %p122
        $region22: #{tpu_custom_call.1} parent=11 // pred_check_branch
          %184 = sbr.rel (%p182) target = $region24
        $region23: #{tpu_custom_call.1} parent=11 // pred_region
          _
        $region24: #{tpu_custom_call.1} parent=11 // pred_fallthru
          _
      $region12: #{tpu_custom_call.1} parent=5 // pred_fallthru
        _
      %p185 = scmp.lt.s32.totalorder %s14, 2
      // Predicated region
      $region25: #{tpu_custom_call.1} parent=5 // pred_check
        %p186 = pneg %p185
      $region26: #{tpu_custom_call.1} parent=5 // pred_check_branch
        %188 = sbr.rel (%p186) target = $region28
      $region27: #{tpu_custom_call.1} parent=5 // pred_region
        // Predicated region
        $region29: #{tpu_custom_call.1} parent=27 // pred_check
          %p189 = pneg %p48
        $region30: #{tpu_custom_call.1} parent=27 // pred_check_branch
          %191 = sbr.rel (%p189) target = $region32
        $region31: #{tpu_custom_call.1} parent=27 // pred_region
          %s192 = smul.u32 2, %s22
          %p193 = scmp.lt.s32.totalorder %s21, 1
          %s194 = scalar_select %p193, %s21, 1
          %p195 = scmp.lt.s32.totalorder %s192, 1
          %s196 = scalar_select %p195, %s192, 1
          %s197 = smul.addr %s194, 2
          %s198 = sadd.s32 %s196, %s197
          %s199 = smul.addr %s198, 4
          %s200 = scalar_lea.vmem %s0, %s199
          %s201 = smul.u32 2, %s22
        $region32: #{tpu_custom_call.1} parent=27 // pred_fallthru
          _
      $region28: #{tpu_custom_call.1} parent=5 // pred_fallthru
        _
      %p202 = scmp.le.s32.totalorder 1, %s14
      %p203 = scmp.lt.s32.totalorder %s14, 3
      %p204 = pnand %p202, %p203
      %p205 = pneg %p204
      // Predicated region
      $region33: #{tpu_custom_call.1} parent=5 // pred_check
        _
      $region34: #{tpu_custom_call.1} parent=5 // pred_check_branch
        %207 = sbr.rel (%p204) target = $region36
      $region35: #{tpu_custom_call.1} parent=5 // pred_region
        %s208 = ssub.s32 %s14, 1
        // Predicated region
        $region37: #{tpu_custom_call.1} parent=35 // pred_check
          %p209 = pneg %p80
        $region38: #{tpu_custom_call.1} parent=35 // pred_check_branch
          %211 = sbr.rel (%p209) target = $region40
        $region39: #{tpu_custom_call.1} parent=35 // pred_region
          %212 = dma.done [#allocation4], 2048
        $region40: #{tpu_custom_call.1} parent=35 // pred_fallthru
          _
        %s213 = smul.u32 2, %s24
        %p214 = scmp.lt.s32.totalorder %s23, 1
        %s215 = scalar_select %p214, %s23, 1
        %p216 = scmp.lt.s32.totalorder %s213, 1
        %s217 = scalar_select %p216, %s213, 1
        %s218 = smul.addr %s215, 2
        %s219 = sadd.s32 %s217, %s218
        %s220 = smul.addr %s219, 4
        %s221 = scalar_lea.vmem %s0, %s220
        %p222 = pneg %p54
        %p223 = pneg %p51
        %p224 = pneg %p80
        %p225 = pneg %p77
        %p226 = pneg %p101
        %p227 = pneg %p98
        %p228 = pneg %p122
        %p229 = pneg %p119
        %p230 = pneg %p148
        %p231 = pneg %p145
        %s232 = sand.u32 %s135, 1
        %s233 = scalar_lea.sflag [#allocation5], %s232
        %s234 = sand.u32 %s135, 1
        %s235 = smul.addr %s234, 16
        %s236 = scalar_lea.vmem [#allocation6], %s235
        %s237 = smul.u32 2, %s24
        %p238 = scmp.lt.s32.totalorder %s23, 1
        %s239 = scalar_select %p238, %s23, 1
        %p240 = scmp.lt.s32.totalorder %s237, 1
        %s241 = scalar_select %p240, %s237, 1
        %s242 = smul.addr %s239, 2
        %s243 = sadd.s32 %s241, %s242
        %s244 = smul.addr %s243, 4
        %s245 = scalar_lea.vmem %s0, %s244
        %s246 = smul.u32 2, %s24
        %s247 = smul.u32 32, %s24
        %p249 = scmp.eq.s32.totalorder %s24, 0
        // Predicated region
        $region41: #{tpu_custom_call.1} parent=35 // pred_check
          %p250 = pneg %p249
        $region42: #{tpu_custom_call.1} parent=35 // pred_check_branch
          %252 = sbr.rel (%p250) target = $region44
        $region43: #{tpu_custom_call.1} parent=35 // pred_region
          %253 = vst [vmem:[#allocation2] sm:$0xf] 0.0
        $region44: #{tpu_custom_call.1} parent=35 // pred_fallthru
          _
        %v254 = vld [vmem:[%s245] sm:$0xff]
        %v255 = vld [vmem:[#allocation2] sm:$0xf]
        %v257 = vcombine.high %v254, %v254
        %v259 = vpack.c.bf16 %v254, %v254
        %v260 = vpack.c.bf16 %v257, %v257
        %v261 = vld [vmem:[#allocation3] sm:$0xf]
        %v262 = vld [vmem:[#allocation3 + $0x4] sm:$0xf]
        %v263 = vld [vmem:[#allocation3 + $0x8] sm:$0xf]
        %v264 = vld [vmem:[#allocation3 + $0xc] sm:$0xf]
        %v265 = vld [vmem:[#allocation3 + $0x10] sm:$0xf]
        %v266 = vld [vmem:[#allocation3 + $0x14] sm:$0xf]
        %v267 = vld [vmem:[#allocation3 + $0x18] sm:$0xf]
        %v268 = vld [vmem:[#allocation3 + $0x1c] sm:$0xf]
        %v269 = vld [vmem:[#allocation3 + $0x20] sm:$0xf]
        %v270 = vld [vmem:[#allocation3 + $0x24] sm:$0xf]
        %v271 = vld [vmem:[#allocation3 + $0x28] sm:$0xf]
        %v272 = vld [vmem:[#allocation3 + $0x2c] sm:$0xf]
        %v273 = vld [vmem:[#allocation3 + $0x30] sm:$0xf]
        %v274 = vld [vmem:[#allocation3 + $0x34] sm:$0xf]
        %v275 = vld [vmem:[#allocation3 + $0x38] sm:$0xf]
        %v276 = vld [vmem:[#allocation3 + $0x3c] sm:$0xf]
        %v277 = vld [vmem:[#allocation3 + $0x40] sm:$0xf]
        %v278 = vld [vmem:[#allocation3 + $0x44] sm:$0xf]
        %v279 = vld [vmem:[#allocation3 + $0x48] sm:$0xf]
        %v280 = vld [vmem:[#allocation3 + $0x4c] sm:$0xf]
        %v281 = vld [vmem:[#allocation3 + $0x50] sm:$0xf]
        %v282 = vld [vmem:[#allocation3 + $0x54] sm:$0xf]
        %v283 = vld [vmem:[#allocation3 + $0x58] sm:$0xf]
        %v284 = vld [vmem:[#allocation3 + $0x5c] sm:$0xf]
        %v285 = vld [vmem:[#allocation3 + $0x60] sm:$0xf]
        %v286 = vld [vmem:[#allocation3 + $0x64] sm:$0xf]
        %v287 = vld [vmem:[#allocation3 + $0x68] sm:$0xf]
        %v288 = vld [vmem:[#allocation3 + $0x6c] sm:$0xf]
        %v289 = vld [vmem:[#allocation3 + $0x70] sm:$0xf]
        %v290 = vld [vmem:[#allocation3 + $0x74] sm:$0xf]
        %v291 = vld [vmem:[#allocation3 + $0x78] sm:$0xf]
        %v292 = vld [vmem:[#allocation3 + $0x7c] sm:$0xf]
        %v325 = vunpack.c.l.b16 %v261
        %v326 = vunpack.c.l.b16 %v262
        %v327 = vunpack.c.l.b16 %v263
        %v328 = vunpack.c.l.b16 %v264
        %v329 = vunpack.c.l.b16 %v265
        %v330 = vunpack.c.l.b16 %v266
        %v331 = vunpack.c.l.b16 %v267
        %v332 = vunpack.c.l.b16 %v268
        %v333 = vunpack.c.l.b16 %v269
        %v334 = vunpack.c.l.b16 %v270
        %v335 = vunpack.c.l.b16 %v271
        %v336 = vunpack.c.l.b16 %v272
        %v337 = vunpack.c.l.b16 %v273
        %v338 = vunpack.c.l.b16 %v274
        %v339 = vunpack.c.l.b16 %v275
        %v340 = vunpack.c.l.b16 %v276
        %v341 = vunpack.c.l.b16 %v277
        %v342 = vunpack.c.l.b16 %v278
        %v343 = vunpack.c.l.b16 %v279
        %v344 = vunpack.c.l.b16 %v280
        %v345 = vunpack.c.l.b16 %v281
        %v346 = vunpack.c.l.b16 %v282
        %v347 = vunpack.c.l.b16 %v283
        %v348 = vunpack.c.l.b16 %v284
        %v349 = vunpack.c.l.b16 %v285
        %v350 = vunpack.c.l.b16 %v286
        %v351 = vunpack.c.l.b16 %v287
        %v352 = vunpack.c.l.b16 %v288
        %v353 = vunpack.c.l.b16 %v289
        %v354 = vunpack.c.l.b16 %v290
        %v355 = vunpack.c.l.b16 %v291
        %v356 = vunpack.c.l.b16 %v292
        %v357 = vpack.c.b16 %v326, %v325
        %v358 = vpack.c.b16 %v328, %v327
        %v359 = vpack.c.b16 %v330, %v329
        %v360 = vpack.c.b16 %v332, %v331
        %v361 = vpack.c.b16 %v334, %v333
        %v362 = vpack.c.b16 %v336, %v335
        %v363 = vpack.c.b16 %v338, %v337
        %v364 = vpack.c.b16 %v340, %v339
        %v365 = vpack.c.b16 %v342, %v341
        %v366 = vpack.c.b16 %v344, %v343
        %v367 = vpack.c.b16 %v346, %v345
        %v368 = vpack.c.b16 %v348, %v347
        %v369 = vpack.c.b16 %v350, %v349
        %v370 = vpack.c.b16 %v352, %v351
        %v371 = vpack.c.b16 %v354, %v353
        %v372 = vpack.c.b16 %v356, %v355
        %389 = vmatprep.subr.bf16.mxu0 0
        %390 = vmatpush1.bf16.msra.mxu0 %v364
        %391 = vmatprep.subr.bf16.mxu0 0
        %392 = vmatpush1.bf16.msra.mxu0 %v363
        %393 = vmatprep.subr.bf16.mxu0 0
        %394 = vmatpush1.bf16.msra.mxu0 %v362
        %395 = vmatprep.subr.bf16.mxu0 0
        %396 = vmatpush1.bf16.msra.mxu0 %v361
        %397 = vmatprep.subr.bf16.mxu0 0
        %398 = vmatpush1.bf16.msra.mxu0 %v360
        %399 = vmatprep.subr.bf16.mxu0 0
        %400 = vmatpush1.bf16.msra.mxu0 %v359
        %401 = vmatprep.subr.bf16.mxu0 0
        %402 = vmatpush1.bf16.msra.mxu0 %v358
        %403 = vmatprep.subr.bf16.mxu0 0
        %404 = vmatpush1.bf16.msra.mxu0 %v357
        %405 = vmatprep.subr.bf16.mxu0 0
        %406 = vmatpush2.bf16.msra.mxu0 %v372
        %407 = vmatprep.subr.bf16.mxu0 0
        %408 = vmatpush2.bf16.msra.mxu0 %v371
        %409 = vmatprep.subr.bf16.mxu0 0
        %410 = vmatpush2.bf16.msra.mxu0 %v370
        %411 = vmatprep.subr.bf16.mxu0 0
        %412 = vmatpush2.bf16.msra.mxu0 %v369
        %413 = vmatprep.subr.bf16.mxu0 0
        %414 = vmatpush2.bf16.msra.mxu0 %v368
        %415 = vmatprep.subr.bf16.mxu0 0
        %416 = vmatpush2.bf16.msra.mxu0 %v367
        %417 = vmatprep.subr.bf16.mxu0 0
        %418 = vmatpush2.bf16.msra.mxu0 %v366
        %419 = vmatprep.subr.bf16.mxu0 0
        %420 = vmatpush2.bf16.msra.mxu0 %v365
        %421 = vmatprep.mubr.bf16.mxu0 %v260
        %422 = vmatmul.mubr.bf16.gmra.mxu0 %v259
        %v423 = vpop.f32.mrf.mxu0
        %v424 = vadd.f32 0.0, %v423
        %v425 = vpop.f32.mrf.mxu0
        %v426 = vpop.f32.mrf.mxu0
        %v427 = vpop.f32.mrf.mxu0
        %428 = vdwg.mxu0
        %v429 = vadd.f32 %v255, %v424
        %430 = vst [vmem:[#allocation2] sm:$0xf] %v429
        // Predicated region
        $region45: #{tpu_custom_call.1} parent=35 // pred_check
          %p431 = pneg %p249
        $region46: #{tpu_custom_call.1} parent=35 // pred_check_branch
          %433 = sbr.rel (%p431) target = $region48
        $region47: #{tpu_custom_call.1} parent=35 // pred_region
          %v434 = vld [vmem:[#allocation2] sm:$0xf]
          %v435 = vlaneseq
          %v436 = vand.u32 %v435, 127
          %vm437 = vcmp.eq.s32.totalorder %v436, 50
          %v438 = vld [vmem:[%s3] sm:$0xff]
          %v439 = vld [vmem:[%s3 + $0x8] sm:$0xff]
          %v440 = vld [vmem:[%s3 + $0x10] sm:$0xff]
          %v441 = vld [vmem:[%s3 + $0x18] sm:$0xff]
          %v442 = vsel %vm437, 1, 0
          %vm443 = vcmp.eq.s32.totalorder %v442, 1
          %445 = vset.pattern.permute.xlu0 0
          %446 = vperm.xlu0 %445, %v438
          %v447 = vpop.permute.xlu0 %446
          %450 = vset.pattern.permute.xlu0 0
          %451 = vperm.xlu0 %450, %v439
          %v452 = vpop.permute.xlu0 %451
          %455 = vset.pattern.permute.xlu0 0
          %456 = vperm.xlu0 %455, %v440
          %v457 = vpop.permute.xlu0 %456
          %460 = vset.pattern.permute.xlu0 0
          %461 = vperm.xlu0 %460, %v441
          %v462 = vpop.permute.xlu0 %461
          %v464 = vsel %vm443, %v447, 0.0
          %v465 = vsel %vm443, %v452, 0.0
          %v466 = vsel %vm443, %v457, 0.0
          %v467 = vsel %vm443, %v462, 0.0
          %v468 = vld [vmem:[%s2] sm:$0xf]
          %v469 = vld [vmem:[%s2 + $0x4] sm:$0xf]
          %v470 = vld [vmem:[%s2 + $0x8] sm:$0xf]
          %v471 = vld [vmem:[%s2 + $0xc] sm:$0xf]
          %v476 = vunpack.c.l.b16 %v468
          %v477 = vunpack.c.l.b16 %v469
          %v478 = vunpack.c.l.b16 %v470
          %v479 = vunpack.c.l.b16 %v471
          %v480 = vpack.c.b16 %v477, %v476
          %v481 = vpack.c.b16 %v479, %v478
          %vm482 = vcmask 31744
          %v484 = vsel %vm482, %v480, 0
          %v487 = vsel %vm482, %v481, 0
          %vm489 = vcmask 1043456
          %v491 = vsel %vm489, %v434, 0
          %493 = vmatprep.subr.mxu0 0.0
          %494 = vmatpush1.msra.mxu0 0.0
          %495 = vmatprep.subr.mxu0 0.0
          %496 = vmatpush1.msra.mxu0 0.0
          %497 = vmatprep.subr.mxu0 0.0
          %498 = vmatpush1.msra.mxu0 0.0
          %499 = vmatprep.subr.mxu0 0.0
          %500 = vmatpush1.msra.mxu0 0.0
          %501 = vmatprep.subr.mxu0 0.0
          %502 = vmatpush1.msra.mxu0 0.0
          %503 = vmatprep.subr.mxu0 0.0
          %504 = vmatpush1.msra.mxu0 0.0
          %505 = vmatprep.subr.mxu0 0.0
          %506 = vmatpush1.msra.mxu0 0.0
          %507 = vmatprep.subr.mxu0 0.0
          %508 = vmatpush1.msra.mxu0 0.0
          %509 = vmatprep.subr.mxu0 0.0
          %510 = vmatpush1.msra.mxu0 0.0
          %511 = vmatprep.subr.mxu0 0.0
          %512 = vmatpush1.msra.mxu0 0.0
          %513 = vmatprep.subr.mxu0 0.0
          %514 = vmatpush1.msra.mxu0 0.0
          %515 = vmatprep.subr.mxu0 0.0
          %516 = vmatpush1.msra.mxu0 0.0
          %517 = vmatprep.subr.mxu0 0.0
          %518 = vmatpush1.msra.mxu0 0.0
          %519 = vmatprep.subr.mxu0 0.0
          %520 = vmatpush1.msra.mxu0 0.0
          %521 = vmatprep.subr.mxu0 0.0
          %522 = vmatpush1.msra.mxu0 0.0
          %523 = vmatprep.subr.mxu0 0.0
          %524 = vmatpush1.msra.mxu0 %v491
          %525 = vmatprep.subr.mxu0 0.0
          %526 = vmatpush2.msra.mxu0 0.0
          %527 = vmatprep.subr.mxu0 0.0
          %528 = vmatpush2.msra.mxu0 0.0
          %529 = vmatprep.subr.mxu0 0.0
          %530 = vmatpush2.msra.mxu0 0.0
          %531 = vmatprep.subr.mxu0 0.0
          %532 = vmatpush2.msra.mxu0 0.0
          %533 = vmatprep.subr.mxu0 0.0
          %534 = vmatpush2.msra.mxu0 0.0
          %535 = vmatprep.subr.mxu0 0.0
          %536 = vmatpush2.msra.mxu0 0.0
          %537 = vmatprep.subr.mxu0 0.0
          %538 = vmatpush2.msra.mxu0 0.0
          %539 = vmatprep.subr.mxu0 0.0
          %540 = vmatpush2.msra.mxu0 0.0
          %541 = vmatprep.subr.mxu0 0.0
          %542 = vmatpush2.msra.mxu0 0.0
          %543 = vmatprep.subr.mxu0 0.0
          %544 = vmatpush2.msra.mxu0 0.0
          %545 = vmatprep.subr.mxu0 0.0
          %546 = vmatpush2.msra.mxu0 0.0
          %547 = vmatprep.subr.mxu0 0.0
          %548 = vmatpush2.msra.mxu0 0.0
          %549 = vmatprep.subr.mxu0 0.0
          %550 = vmatpush2.msra.mxu0 0.0
          %551 = vmatprep.subr.mxu0 0.0
          %552 = vmatpush2.msra.mxu0 0.0
          %553 = vmatprep.subr.mxu0 0.0
          %554 = vmatpush2.msra.mxu0 0.0
          %555 = vmatprep.subr.mxu0 0.0
          %556 = vmatpush2.msra.mxu0 0.0
          %557 = vmatprep.mubr.bf16.mxu0 0
          %558 = vmatmul.mubr.bf16.gmra.mxu0 %v484
          %v559 = vpop.f32.mrf.mxu0
          %v560 = vadd.f32 0.0, %v559
          %v561 = vpop.f32.mrf.mxu0
          %v562 = vpop.f32.mrf.mxu0
          %v563 = vadd.f32 0.0, %v562
          %v564 = vpop.f32.mrf.mxu0
          %565 = vmatprep.mubr.bf16.mxu0 0
          %566 = vmatmul.mubr.bf16.gmra.mxu0 %v487
          %v567 = vpop.f32.mrf.mxu0
          %v568 = vadd.f32 0.0, %v567
          %v569 = vpop.f32.mrf.mxu0
          %v570 = vpop.f32.mrf.mxu0
          %v571 = vadd.f32 0.0, %v570
          %v572 = vpop.f32.mrf.mxu0
          %573 = vdwg.mxu0
          %vm574 = vcmp.ge.s32.totalorder %v436, 0
          %vm575 = vcmp.lt.s32.totalorder %v436, 1
          %vm576 = vmand %vm574, %vm575
          %v577 = vsel %vm576, 1, 0
          %vm578 = vcmp.eq.s32.totalorder %v577, 1
          %v579 = vsel %vm578, %v560, 0.0
          %v580 = vsel %vm578, %v563, 0.0
          %v581 = vsel %vm578, %v568, 0.0
          %v582 = vsel %vm578, %v571, 0.0
          %v583 = vadd.f32 %v464, %v579
          %v584 = vadd.f32 %v465, %v580
          %v585 = vadd.f32 %v466, %v581
          %v586 = vadd.f32 %v467, %v582
          %s587 = scalar_lea.vmem %s2, 16
          %v588 = vld [vmem:[%s587] sm:$0xf]
          %v589 = vld [vmem:[%s587 + $0x4] sm:$0xf]
          %v590 = vld [vmem:[%s587 + $0x8] sm:$0xf]
          %v591 = vld [vmem:[%s587 + $0xc] sm:$0xf]
          %v596 = vunpack.c.l.b16 %v588
          %v597 = vunpack.c.l.b16 %v589
          %v598 = vunpack.c.l.b16 %v590
          %v599 = vunpack.c.l.b16 %v591
          %v600 = vpack.c.b16 %v597, %v596
          %v601 = vpack.c.b16 %v599, %v598
          %v603 = vsel %vm482, %v600, 0
          %v606 = vsel %vm482, %v601, 0
          %608 = vmatprep.subr.mxu0 0.0
          %609 = vmatpush1.msra.mxu0 0.0
          %610 = vmatprep.subr.mxu0 0.0
          %611 = vmatpush1.msra.mxu0 0.0
          %612 = vmatprep.subr.mxu0 0.0
          %613 = vmatpush1.msra.mxu0 0.0
          %614 = vmatprep.subr.mxu0 0.0
          %615 = vmatpush1.msra.mxu0 0.0
          %616 = vmatprep.subr.mxu0 0.0
          %617 = vmatpush1.msra.mxu0 0.0
          %618 = vmatprep.subr.mxu0 0.0
          %619 = vmatpush1.msra.mxu0 0.0
          %620 = vmatprep.subr.mxu0 0.0
          %621 = vmatpush1.msra.mxu0 0.0
          %622 = vmatprep.subr.mxu0 0.0
          %623 = vmatpush1.msra.mxu0 0.0
          %624 = vmatprep.subr.mxu0 0.0
          %625 = vmatpush1.msra.mxu0 0.0
          %626 = vmatprep.subr.mxu0 0.0
          %627 = vmatpush1.msra.mxu0 0.0
          %628 = vmatprep.subr.mxu0 0.0
          %629 = vmatpush1.msra.mxu0 0.0
          %630 = vmatprep.subr.mxu0 0.0
          %631 = vmatpush1.msra.mxu0 0.0
          %632 = vmatprep.subr.mxu0 0.0
          %633 = vmatpush1.msra.mxu0 0.0
          %634 = vmatprep.subr.mxu0 0.0
          %635 = vmatpush1.msra.mxu0 0.0
          %636 = vmatprep.subr.mxu0 0.0
          %637 = vmatpush1.msra.mxu0 0.0
          %638 = vmatprep.subr.mxu0 0.0
          %639 = vmatpush1.msra.mxu0 %v491
          %640 = vmatprep.subr.mxu0 0.0
          %641 = vmatpush2.msra.mxu0 0.0
          %642 = vmatprep.subr.mxu0 0.0
          %643 = vmatpush2.msra.mxu0 0.0
          %644 = vmatprep.subr.mxu0 0.0
          %645 = vmatpush2.msra.mxu0 0.0
          %646 = vmatprep.subr.mxu0 0.0
          %647 = vmatpush2.msra.mxu0 0.0
          %648 = vmatprep.subr.mxu0 0.0
          %649 = vmatpush2.msra.mxu0 0.0
          %650 = vmatprep.subr.mxu0 0.0
          %651 = vmatpush2.msra.mxu0 0.0
          %652 = vmatprep.subr.mxu0 0.0
          %653 = vmatpush2.msra.mxu0 0.0
          %654 = vmatprep.subr.mxu0 0.0
          %655 = vmatpush2.msra.mxu0 0.0
          %656 = vmatprep.subr.mxu0 0.0
          %657 = vmatpush2.msra.mxu0 0.0
          %658 = vmatprep.subr.mxu0 0.0
          %659 = vmatpush2.msra.mxu0 0.0
          %660 = vmatprep.subr.mxu0 0.0
          %661 = vmatpush2.msra.mxu0 0.0
          %662 = vmatprep.subr.mxu0 0.0
          %663 = vmatpush2.msra.mxu0 0.0
          %664 = vmatprep.subr.mxu0 0.0
          %665 = vmatpush2.msra.mxu0 0.0
          %666 = vmatprep.subr.mxu0 0.0
          %667 = vmatpush2.msra.mxu0 0.0
          %668 = vmatprep.subr.mxu0 0.0
          %669 = vmatpush2.msra.mxu0 0.0
          %670 = vmatprep.subr.mxu0 0.0
          %671 = vmatpush2.msra.mxu0 0.0
          %672 = vmatprep.mubr.bf16.mxu0 0
          %673 = vmatmul.mubr.bf16.gmra.mxu0 %v603
          %v674 = vpop.f32.mrf.mxu0
          %v675 = vadd.f32 0.0, %v674
          %v676 = vpop.f32.mrf.mxu0
          %v677 = vpop.f32.mrf.mxu0
          %v678 = vadd.f32 0.0, %v677
          %v679 = vpop.f32.mrf.mxu0
          %680 = vmatprep.mubr.bf16.mxu0 0
          %681 = vmatmul.mubr.bf16.gmra.mxu0 %v606
          %v682 = vpop.f32.mrf.mxu0
          %v683 = vadd.f32 0.0, %v682
          %v684 = vpop.f32.mrf.mxu0
          %v685 = vpop.f32.mrf.mxu0
          %v686 = vadd.f32 0.0, %v685
          %v687 = vpop.f32.mrf.mxu0
          %688 = vdwg.mxu0
          %vm689 = vcmp.ge.s32.totalorder %v436, 1
          %vm690 = vcmp.lt.s32.totalorder %v436, 5
          %vm691 = vmand %vm689, %vm690
          %v692 = vsel %vm691, 1, 0
          %vm693 = vcmp.eq.s32.totalorder %v692, 1
          %v694 = vsel %vm693, %v675, 0.0
          %v695 = vsel %vm693, %v678, 0.0
          %v696 = vsel %vm693, %v683, 0.0
          %v697 = vsel %vm693, %v686, 0.0
          %v698 = vadd.f32 %v583, %v694
          %v699 = vadd.f32 %v584, %v695
          %v700 = vadd.f32 %v585, %v696
          %v701 = vadd.f32 %v586, %v697
          %s702 = scalar_lea.vmem %s2, 32
          %v703 = vld [vmem:[%s702] sm:$0xf]
          %v704 = vld [vmem:[%s702 + $0x4] sm:$0xf]
          %v705 = vld [vmem:[%s702 + $0x8] sm:$0xf]
          %v706 = vld [vmem:[%s702 + $0xc] sm:$0xf]
          %v711 = vunpack.c.l.b16 %v703
          %v712 = vunpack.c.l.b16 %v704
          %v713 = vunpack.c.l.b16 %v705
          %v714 = vunpack.c.l.b16 %v706
          %v715 = vpack.c.b16 %v712, %v711
          %v716 = vpack.c.b16 %v714, %v713
          %v718 = vsel %vm482, %v715, 0
          %v721 = vsel %vm482, %v716, 0
          %723 = vmatprep.subr.mxu0 0.0
          %724 = vmatpush1.msra.mxu0 0.0
          %725 = vmatprep.subr.mxu0 0.0
          %726 = vmatpush1.msra.mxu0 0.0
          %727 = vmatprep.subr.mxu0 0.0
          %728 = vmatpush1.msra.mxu0 0.0
          %729 = vmatprep.subr.mxu0 0.0
          %730 = vmatpush1.msra.mxu0 0.0
          %731 = vmatprep.subr.mxu0 0.0
          %732 = vmatpush1.msra.mxu0 0.0
          %733 = vmatprep.subr.mxu0 0.0
          %734 = vmatpush1.msra.mxu0 0.0
          %735 = vmatprep.subr.mxu0 0.0
          %736 = vmatpush1.msra.mxu0 0.0
          %737 = vmatprep.subr.mxu0 0.0
          %738 = vmatpush1.msra.mxu0 0.0
          %739 = vmatprep.subr.mxu0 0.0
          %740 = vmatpush1.msra.mxu0 0.0
          %741 = vmatprep.subr.mxu0 0.0
          %742 = vmatpush1.msra.mxu0 0.0
          %743 = vmatprep.subr.mxu0 0.0
          %744 = vmatpush1.msra.mxu0 0.0
          %745 = vmatprep.subr.mxu0 0.0
          %746 = vmatpush1.msra.mxu0 0.0
          %747 = vmatprep.subr.mxu0 0.0
          %748 = vmatpush1.msra.mxu0 0.0
          %749 = vmatprep.subr.mxu0 0.0
          %750 = vmatpush1.msra.mxu0 0.0
          %751 = vmatprep.subr.mxu0 0.0
          %752 = vmatpush1.msra.mxu0 0.0
          %753 = vmatprep.subr.mxu0 0.0
          %754 = vmatpush1.msra.mxu0 %v491
          %755 = vmatprep.subr.mxu0 0.0
          %756 = vmatpush2.msra.mxu0 0.0
          %757 = vmatprep.subr.mxu0 0.0
          %758 = vmatpush2.msra.mxu0 0.0
          %759 = vmatprep.subr.mxu0 0.0
          %760 = vmatpush2.msra.mxu0 0.0
          %761 = vmatprep.subr.mxu0 0.0
          %762 = vmatpush2.msra.mxu0 0.0
          %763 = vmatprep.subr.mxu0 0.0
          %764 = vmatpush2.msra.mxu0 0.0
          %765 = vmatprep.subr.mxu0 0.0
          %766 = vmatpush2.msra.mxu0 0.0
          %767 = vmatprep.subr.mxu0 0.0
          %768 = vmatpush2.msra.mxu0 0.0
          %769 = vmatprep.subr.mxu0 0.0
          %770 = vmatpush2.msra.mxu0 0.0
          %771 = vmatprep.subr.mxu0 0.0
          %772 = vmatpush2.msra.mxu0 0.0
          %773 = vmatprep.subr.mxu0 0.0
          %774 = vmatpush2.msra.mxu0 0.0
          %775 = vmatprep.subr.mxu0 0.0
          %776 = vmatpush2.msra.mxu0 0.0
          %777 = vmatprep.subr.mxu0 0.0
          %778 = vmatpush2.msra.mxu0 0.0
          %779 = vmatprep.subr.mxu0 0.0
          %780 = vmatpush2.msra.mxu0 0.0
          %781 = vmatprep.subr.mxu0 0.0
          %782 = vmatpush2.msra.mxu0 0.0
          %783 = vmatprep.subr.mxu0 0.0
          %784 = vmatpush2.msra.mxu0 0.0
          %785 = vmatprep.subr.mxu0 0.0
          %786 = vmatpush2.msra.mxu0 0.0
          %787 = vmatprep.mubr.bf16.mxu0 0
          %788 = vmatmul.mubr.bf16.gmra.mxu0 %v718
          %v789 = vpop.f32.mrf.mxu0
          %v790 = vadd.f32 0.0, %v789
          %v791 = vpop.f32.mrf.mxu0
          %v792 = vpop.f32.mrf.mxu0
          %v793 = vadd.f32 0.0, %v792
          %v794 = vpop.f32.mrf.mxu0
          %795 = vmatprep.mubr.bf16.mxu0 0
          %796 = vmatmul.mubr.bf16.gmra.mxu0 %v721
          %v797 = vpop.f32.mrf.mxu0
          %v798 = vadd.f32 0.0, %v797
          %v799 = vpop.f32.mrf.mxu0
          %v800 = vpop.f32.mrf.mxu0
          %v801 = vadd.f32 0.0, %v800
          %v802 = vpop.f32.mrf.mxu0
          %803 = vdwg.mxu0
          %vm804 = vcmp.ge.s32.totalorder %v436, 5
          %vm805 = vcmp.lt.s32.totalorder %v436, 14
          %vm806 = vmand %vm804, %vm805
          %v807 = vsel %vm806, 1, 0
          %vm808 = vcmp.eq.s32.totalorder %v807, 1
          %v809 = vsel %vm808, %v790, 0.0
          %v810 = vsel %vm808, %v793, 0.0
          %v811 = vsel %vm808, %v798, 0.0
          %v812 = vsel %vm808, %v801, 0.0
          %v813 = vadd.f32 %v698, %v809
          %v814 = vadd.f32 %v699, %v810
          %v815 = vadd.f32 %v700, %v811
          %v816 = vadd.f32 %v701, %v812
          %s817 = scalar_lea.vmem %s2, 48
          %v818 = vld [vmem:[%s817] sm:$0xf]
          %v819 = vld [vmem:[%s817 + $0x4] sm:$0xf]
          %v820 = vld [vmem:[%s817 + $0x8] sm:$0xf]
          %v821 = vld [vmem:[%s817 + $0xc] sm:$0xf]
          %v826 = vunpack.c.l.b16 %v818
          %v827 = vunpack.c.l.b16 %v819
          %v828 = vunpack.c.l.b16 %v820
          %v829 = vunpack.c.l.b16 %v821
          %v830 = vpack.c.b16 %v827, %v826
          %v831 = vpack.c.b16 %v829, %v828
          %v833 = vsel %vm482, %v830, 0
          %v836 = vsel %vm482, %v831, 0
          %838 = vmatprep.subr.mxu0 0.0
          %839 = vmatpush1.msra.mxu0 0.0
          %840 = vmatprep.subr.mxu0 0.0
          %841 = vmatpush1.msra.mxu0 0.0
          %842 = vmatprep.subr.mxu0 0.0
          %843 = vmatpush1.msra.mxu0 0.0
          %844 = vmatprep.subr.mxu0 0.0
          %845 = vmatpush1.msra.mxu0 0.0
          %846 = vmatprep.subr.mxu0 0.0
          %847 = vmatpush1.msra.mxu0 0.0
          %848 = vmatprep.subr.mxu0 0.0
          %849 = vmatpush1.msra.mxu0 0.0
          %850 = vmatprep.subr.mxu0 0.0
          %851 = vmatpush1.msra.mxu0 0.0
          %852 = vmatprep.subr.mxu0 0.0
          %853 = vmatpush1.msra.mxu0 0.0
          %854 = vmatprep.subr.mxu0 0.0
          %855 = vmatpush1.msra.mxu0 0.0
          %856 = vmatprep.subr.mxu0 0.0
          %857 = vmatpush1.msra.mxu0 0.0
          %858 = vmatprep.subr.mxu0 0.0
          %859 = vmatpush1.msra.mxu0 0.0
          %860 = vmatprep.subr.mxu0 0.0
          %861 = vmatpush1.msra.mxu0 0.0
          %862 = vmatprep.subr.mxu0 0.0
          %863 = vmatpush1.msra.mxu0 0.0
          %864 = vmatprep.subr.mxu0 0.0
          %865 = vmatpush1.msra.mxu0 0.0
          %866 = vmatprep.subr.mxu0 0.0
          %867 = vmatpush1.msra.mxu0 0.0
          %868 = vmatprep.subr.mxu0 0.0
          %869 = vmatpush1.msra.mxu0 %v491
          %870 = vmatprep.subr.mxu0 0.0
          %871 = vmatpush2.msra.mxu0 0.0
          %872 = vmatprep.subr.mxu0 0.0
          %873 = vmatpush2.msra.mxu0 0.0
          %874 = vmatprep.subr.mxu0 0.0
          %875 = vmatpush2.msra.mxu0 0.0
          %876 = vmatprep.subr.mxu0 0.0
          %877 = vmatpush2.msra.mxu0 0.0
          %878 = vmatprep.subr.mxu0 0.0
          %879 = vmatpush2.msra.mxu0 0.0
          %880 = vmatprep.subr.mxu0 0.0
          %881 = vmatpush2.msra.mxu0 0.0
          %882 = vmatprep.subr.mxu0 0.0
          %883 = vmatpush2.msra.mxu0 0.0
          %884 = vmatprep.subr.mxu0 0.0
          %885 = vmatpush2.msra.mxu0 0.0
          %886 = vmatprep.subr.mxu0 0.0
          %887 = vmatpush2.msra.mxu0 0.0
          %888 = vmatprep.subr.mxu0 0.0
          %889 = vmatpush2.msra.mxu0 0.0
          %890 = vmatprep.subr.mxu0 0.0
          %891 = vmatpush2.msra.mxu0 0.0
          %892 = vmatprep.subr.mxu0 0.0
          %893 = vmatpush2.msra.mxu0 0.0
          %894 = vmatprep.subr.mxu0 0.0
          %895 = vmatpush2.msra.mxu0 0.0
          %896 = vmatprep.subr.mxu0 0.0
          %897 = vmatpush2.msra.mxu0 0.0
          %898 = vmatprep.subr.mxu0 0.0
          %899 = vmatpush2.msra.mxu0 0.0
          %900 = vmatprep.subr.mxu0 0.0
          %901 = vmatpush2.msra.mxu0 0.0
          %902 = vmatprep.mubr.bf16.mxu0 0
          %903 = vmatmul.mubr.bf16.gmra.mxu0 %v833
          %v904 = vpop.f32.mrf.mxu0
          %v905 = vadd.f32 0.0, %v904
          %v906 = vpop.f32.mrf.mxu0
          %v907 = vpop.f32.mrf.mxu0
          %v908 = vadd.f32 0.0, %v907
          %v909 = vpop.f32.mrf.mxu0
          %910 = vmatprep.mubr.bf16.mxu0 0
          %911 = vmatmul.mubr.bf16.gmra.mxu0 %v836
          %v912 = vpop.f32.mrf.mxu0
          %v913 = vadd.f32 0.0, %v912
          %v914 = vpop.f32.mrf.mxu0
          %v915 = vpop.f32.mrf.mxu0
          %v916 = vadd.f32 0.0, %v915
          %v917 = vpop.f32.mrf.mxu0
          %918 = vdwg.mxu0
          %vm919 = vcmp.ge.s32.totalorder %v436, 14
          %vm920 = vcmp.lt.s32.totalorder %v436, 50
          %vm921 = vmand %vm919, %vm920
          %v922 = vsel %vm921, 1, 0
          %vm923 = vcmp.eq.s32.totalorder %v922, 1
          %v924 = vsel %vm923, %v905, 0.0
          %v925 = vsel %vm923, %v908, 0.0
          %v926 = vsel %vm923, %v913, 0.0
          %v927 = vsel %vm923, %v916, 0.0
          %v928 = vadd.f32 %v813, %v924
          %v929 = vadd.f32 %v814, %v925
          %v930 = vadd.f32 %v815, %v926
          %v931 = vadd.f32 %v816, %v927
          %v932 = vpack.c.bf16 %v929, %v928
          %v933 = vpack.c.bf16 %v931, %v930
          %v936 = vunpack.c.l.b16 %v932
          %v937 = vunpack.c.h.b16 %v932
          %v938 = vunpack.c.l.b16 %v933
          %v939 = vunpack.c.h.b16 %v933
          %v940 = vpack.c.b16 %v936, %v936
          %v941 = vpack.c.b16 %v937, %v937
          %v942 = vpack.c.b16 %v938, %v938
          %v943 = vpack.c.b16 %v939, %v939
          %948 = vst [vmem:[%s236] sm:$0xf] %v940
          %949 = vst [vmem:[%s236 + $0x4] sm:$0xf] %v941
          %950 = vst [vmem:[%s236 + $0x8] sm:$0xf] %v942
          %951 = vst [vmem:[%s236 + $0xc] sm:$0xf] %v943
        $region48: #{tpu_custom_call.1} parent=35 // pred_fallthru
          _
        %s952 = sand.u32 %s135, 1
        %s953 = scalar_lea.sflag [#allocation5], %s952
        %s954 = sand.u32 %s135, 1
        %s955 = smul.addr %s954, 16
        %s956 = scalar_lea.vmem [#allocation6], %s955
        // Predicated region
        $region49: #{tpu_custom_call.1} parent=35 // pred_check
          %p957 = pneg %p145
        $region50: #{tpu_custom_call.1} parent=35 // pred_check_branch
          %959 = sbr.rel (%p957) target = $region52
        $region51: #{tpu_custom_call.1} parent=35 // pred_region
          %s961 = ssub.s32 256, 256
          %962 = vsyncadd %s953, %s961
          %s963 = smul.addr %s23, 4
          %s964 = smul.addr %s963, 64
          %s965 = scalar_lea.hbm %s4, %s964
          %s966 = sshll.u32 %s956, 4
          %s967 = int_to_ptr.vmem [resolvable:$true] %s966
          %972 = dma.vmem_to_hbm [thread:$0]  %s967, 256, %s965, %s953, 64, 64, 4
        $region52: #{tpu_custom_call.1} parent=35 // pred_fallthru
          _
      $region36: #{tpu_custom_call.1} parent=5 // pred_fallthru
        _
      %p973 = scmp.le.s32.totalorder 2, %s14
      // Predicated region
      $region53: #{tpu_custom_call.1} parent=5 // pred_check
        %p974 = pneg %p973
      $region54: #{tpu_custom_call.1} parent=5 // pred_check_branch
        %976 = sbr.rel (%p974) target = $region56
      $region55: #{tpu_custom_call.1} parent=5 // pred_region
        %s977 = ssub.s32 %s14, 2
        // Predicated region
        $region57: #{tpu_custom_call.1} parent=55 // pred_check
          %p978 = pneg %p151
        $region58: #{tpu_custom_call.1} parent=55 // pred_check_branch
          %980 = sbr.rel (%p978) target = $region60
        $region59: #{tpu_custom_call.1} parent=55 // pred_region
          %s981 = sand.u32 %s136, 1
          %s982 = scalar_lea.sflag [#allocation5], %s981
          %s983 = sand.u32 %s136, 1
          %s984 = smul.addr %s983, 16
          %s985 = scalar_lea.vmem [#allocation6], %s984
          %986 = dma.done %s982, 256
        $region60: #{tpu_custom_call.1} parent=55 // pred_fallthru
          _
      $region56: #{tpu_custom_call.1} parent=5 // pred_fallthru
        _
    $region6: #{tpu_custom_call.1} parent=1 // loop_footer
      %s18 = sadd.s32 1, %s14
    $region7: #{tpu_custom_call.1} parent=1 // loop_footer_branch
      %13 = sbr.rel target = $region3
    $region8: #{tpu_custom_call.1} parent=1 // loop_exit
      _
    %987 = vsyncpa [#allocation4], 1
    %s988 = scalar_lea.sflag [#allocation4], 1
    %989 = vsyncpa %s988, 1
    %990 = vsyncpa [#allocation5], 1
    %s991 = scalar_lea.sflag [#allocation5], 1
    %992 = vsyncpa %s991, 1

</llo_original>
